<compile_context>
chip_gen: v7x
topology: tpu7x:2x2x1
jax: 0.10.0
libtpu: 0.0.40
codegen_flags: <defaults>
</compile_context>

<pallas_src>
import functools

import jax
import jax.numpy as jnp
from jax import lax
from jax.experimental import pallas as pl
from jax.experimental.pallas import tpu as pltpu

_MASK_BIAS = -1e30       # additive bias for non-edges (exp underflows to 0)
_VALID_THRESH = -1e20    # rows whose max score is below this have no in-edges


def _elu(x):
    return jnp.where(x > 0, x, jnp.expm1(x))


def _round_up(x, m):
    return (x + m - 1) // m * m


def _pick_tile_v(n_pad, vmem_budget_bytes=12 * 1024 * 1024):
    """Largest multiple-of-128 destination tile that keeps the attention
    kernel's VMEM footprint under budget (works for v5e 16MiB scoped default
    and v7x's 64MiB physical VMEM)."""
    # Per destination row in flight: double-buffered bf16 adj block
    # + ~3 live f32 (TILE, N) softmax temporaries (one head at a time).
    per_row_bytes = 2 * 2 * n_pad + 3 * 4 * n_pad
    cap = max(vmem_budget_bytes // per_row_bytes, 128)
    tile = min(int(cap), 512, n_pad)
    tile = max((tile // 128) * 128, 128)
    while n_pad % tile:
        tile -= 128
    return tile


def _head_matrix(a):
    """(H, D) per-head attention vector -> (H*D, H) block-diagonal matrix so
    that z @ A computes <z_h, a_h> for all heads with one MXU op."""
    H, D = a.shape
    eye = jnp.eye(H, dtype=a.dtype)
    return (a[:, :, None] * eye[:, None, :]).reshape(H * D, H)


# ---------------------------------------------------------------------------
# Kernel 1: shared fc projection + batched per-head attention scores.
# ---------------------------------------------------------------------------
def gat_project_kernel(h_ref, w_ref, alT_ref, ar_ref, z_ref, elT_ref, er_ref):
    h = h_ref[...].astype(jnp.bfloat16)                  # (T, Fin)
    w = w_ref[...].astype(jnp.bfloat16)                  # (Fin, H*D)
    z = jnp.dot(h, w, preferred_element_type=jnp.float32)  # (T, H*D) f32 acc
    zb = z.astype(jnp.bfloat16)

    alT = alT_ref[...].astype(jnp.bfloat16)              # (H, H*D)
    ar = ar_ref[...].astype(jnp.bfloat16)                # (H*D, H)
    # el^T for all heads at once: (H, H*D) x (T, H*D)^T -> (H, T)
    elT = lax.dot_general(alT, zb, (((1,), (1,)), ((), ())),
                          preferred_element_type=jnp.float32)
    er = jnp.dot(zb, ar, preferred_element_type=jnp.float32)   # (T, H)

    z_ref[...] = zb
    elT_ref[...] = elT
    er_ref[...] = er


def gat_project(h, w, alT, ar_mat, *, tile):
    n_pad, fin = h.shape
    hd_total = w.shape[1]
    num_heads = alT.shape[0]
    grid = (n_pad // tile,)
    return pl.pallas_call(
        gat_project_kernel,
        grid=grid,
        in_specs=[
            pl.BlockSpec((tile, fin), lambda i: (i, 0)),           # h
            pl.BlockSpec((fin, hd_total), lambda i: (0, 0)),       # W
            pl.BlockSpec((num_heads, hd_total), lambda i: (0, 0)),  # a_l^T
            pl.BlockSpec((hd_total, num_heads), lambda i: (0, 0)),  # a_r
        ],
        out_specs=[
            pl.BlockSpec((tile, hd_total), lambda i: (i, 0)),      # z (bf16)
            pl.BlockSpec((num_heads, tile), lambda i: (0, i)),     # el^T
            pl.BlockSpec((tile, num_heads), lambda i: (i, 0)),     # er
        ],
        out_shape=[
            jax.ShapeDtypeStruct((n_pad, hd_total), jnp.bfloat16),
            jax.ShapeDtypeStruct((num_heads, n_pad), jnp.float32),
            jax.ShapeDtypeStruct((n_pad, num_heads), jnp.float32),
        ],
        compiler_params=pltpu.CompilerParams(
            dimension_semantics=("parallel",)),
    )(h, w, alT, ar_mat)


# ---------------------------------------------------------------------------
# Kernel 2: masked edge-softmax attention + aggregation (+ optional fused
# final Linear), tiled over destination nodes v.
# ---------------------------------------------------------------------------
def _gat_heads(elT, er, z, adj, num_heads, head_dim, negative_slope):
    """Returns list of per-head ELU'd aggregated outputs, each (T, D) f32."""
    neg = jnp.float32(negative_slope)
    # Single mask: additive -1e30 bias on non-edges (exp underflows to 0).
    bias = jnp.where(adj > 0, jnp.float32(0.0), jnp.float32(_MASK_BIAS))
    outs = []
    H, D = num_heads, head_dim
    for hd in range(H):
        el_row = elT[hd:hd + 1, :]                         # (1, N)   src scores
        er_col = er[:, hd:hd + 1]                          # (T, 1)   dst scores
        e = er_col + el_row                                # (T, N)
        e = jnp.where(e > 0, e, neg * e) + bias            # leaky_relu + mask
        m = jnp.max(e, axis=1, keepdims=True)              # (T, 1)
        p = jnp.exp(e - m)                                 # (T, N)
        s = jnp.sum(p, axis=1, keepdims=True)              # (T, 1)
        # Deferred normalization; rows with no incoming edges -> 0 (matches
        # the self-loop / allow_zero_in_degree convention; also zeroes padding).
        scale = jnp.where(m > _VALID_THRESH,
                          pl.reciprocal(s, approx=True), 0.0)
        zh = z[:, hd * D:(hd + 1) * D]                     # (N, D) bf16
        agg = jnp.dot(p.astype(jnp.bfloat16), zh,
                      preferred_element_type=jnp.float32)  # (T, D)
        outs.append(_elu(agg * scale))
    return outs


def gat_attn_kernel(elT_ref, er_ref, z_ref, adj_ref, out_ref, *,
                    num_heads, head_dim, negative_slope):
    outs = _gat_heads(elT_ref[...], er_ref[...], z_ref[...], adj_ref[...],
                      num_heads, head_dim, negative_slope)
    D = head_dim
    for hd, out_h in enumerate(outs):
        out_ref[:, hd * D:(hd + 1) * D] = out_h            # == .flatten(1)


def gat_attn_linear_kernel(elT_ref, er_ref, z_ref, adj_ref, lw_ref, lb_ref,
                           out_ref, *, num_heads, head_dim, negative_slope):
    outs = _gat_heads(elT_ref[...], er_ref[...], z_ref[...], adj_ref[...],
                      num_heads, head_dim, negative_slope)
    D = head_dim
    lw = lw_ref[...]                                       # (H*D, C) f32
    acc = jnp.zeros((out_ref.shape[0], out_ref.shape[1]), jnp.float32)
    for hd, out_h in enumerate(outs):
        acc = acc + jnp.dot(out_h, lw[hd * D:(hd + 1) * D, :],
                            preferred_element_type=jnp.float32)
    out_ref[...] = acc + lb_ref[...]


def gat_attend(elT, er, z, adj, *, tile, num_heads, head_dim,
               negative_slope=0.2, lin_w=None, lin_b=None):
    n_pad = adj.shape[0]
    hd_total = num_heads * head_dim
    grid = (n_pad // tile,)
    fuse_linear = lin_w is not None
    out_dim = lin_w.shape[1] if fuse_linear else hd_total

    in_specs = [
        pl.BlockSpec((num_heads, n_pad), lambda i: (0, 0)),   # el^T (resident)
        pl.BlockSpec((tile, num_heads), lambda i: (i, 0)),    # er tile
        pl.BlockSpec((n_pad, hd_total), lambda i: (0, 0)),    # z    (resident)
        pl.BlockSpec((tile, n_pad), lambda i: (i, 0)),        # adj tile (bf16)
    ]
    args = [elT, er, z, adj]
    if fuse_linear:
        in_specs += [
            pl.BlockSpec((hd_total, out_dim), lambda i: (0, 0)),
            pl.BlockSpec((1, out_dim), lambda i: (0, 0)),
        ]
        args += [lin_w, lin_b]
        kern = functools.partial(gat_attn_linear_kernel, num_heads=num_heads,
                                 head_dim=head_dim,
                                 negative_slope=negative_slope)
    else:
        kern = functools.partial(gat_attn_kernel, num_heads=num_heads,
                                 head_dim=head_dim,
                                 negative_slope=negative_slope)

    cost = pl.CostEstimate(
        flops=2 * num_heads * n_pad * n_pad * head_dim
              + 6 * num_heads * n_pad * n_pad,
        transcendentals=num_heads * n_pad * n_pad,
        bytes_accessed=n_pad * n_pad * 2 + n_pad * hd_total * 2
                       + n_pad * num_heads * 8 + n_pad * out_dim * 4)

    return pl.pallas_call(
        kern,
        grid=grid,
        in_specs=in_specs,
        out_specs=pl.BlockSpec((tile, out_dim), lambda i: (i, 0)),
        out_shape=jax.ShapeDtypeStruct((n_pad, out_dim), jnp.float32),
        compiler_params=pltpu.CompilerParams(
            dimension_semantics=("parallel",)),
        cost_estimate=cost,
    )(*args)


# ---------------------------------------------------------------------------
# Model wrapper.
# ---------------------------------------------------------------------------
def gatlin_forward(params, adj, x, *, num_heads, head_dim, negative_slope=0.2):
    n = x.shape[0]
    n_pad = _round_up(n, 128)
    tile = _pick_tile_v(n_pad)

    # adj stored as bf16 (0/1 exactly representable): halves HBM traffic/VMEM.
    adj_p = jnp.zeros((n_pad, n_pad), jnp.bfloat16)
    adj_p = adj_p.at[:n, :n].set(adj.astype(jnp.bfloat16))
    h = jnp.zeros((n_pad, x.shape[1]), jnp.float32).at[:n, :].set(
        x.astype(jnp.float32))

    # TODO(synk): layers are still separate pallas_calls, so adj is re-streamed
    # from HBM once per layer; a fully fused multi-layer kernel would need the
    # whole intermediate h resident across v-tiles.
    num_gat = len(params["gat"])
    for li, (w, al, ar) in enumerate(params["gat"]):
        alT = _head_matrix(al).T               # (H, H*D)
        ar_m = _head_matrix(ar)                # (H*D, H)
        z, elT, er = gat_project(h, w, alT, ar_m, tile=tile)
        last = li == num_gat - 1
        h = gat_attend(elT, er, z, adj_p, tile=tile, num_heads=num_heads,
                       head_dim=head_dim, negative_slope=negative_slope,
                       lin_w=params["lin_w"] if last else None,
                       lin_b=params["lin_b"] if last else None)
    return h[:n]


def init_params(key, *, num_layers, in_dim, num_hidden, num_heads, num_classes):
    H, D = num_heads, num_hidden
    gat_params = []
    fan_in = in_dim
    for _ in range(num_layers):
        key, kw, kl, kr = jax.random.split(key, 4)
        scale = (2.0 / (fan_in + H * D)) ** 0.5          # xavier-ish
        w = scale * jax.random.normal(kw, (fan_in, H * D), dtype=jnp.float32)
        al = 0.1 * jax.random.normal(kl, (H, D), dtype=jnp.float32)
        ar = 0.1 * jax.random.normal(kr, (H, D), dtype=jnp.float32)
        gat_params.append((w, al, ar))
        fan_in = H * D
    key, kw, kb = jax.random.split(key, 3)
    scale = (2.0 / (fan_in + num_classes)) ** 0.5
    lin_w = scale * jax.random.normal(kw, (fan_in, num_classes), dtype=jnp.float32)
    lin_b = 0.01 * jax.random.normal(kb, (1, num_classes), dtype=jnp.float32)
    return {"gat": gat_params, "lin_w": lin_w, "lin_b": lin_b}


if __name__ == "__main__":
    # Small, module-consistent shapes.
    N = 128             # number of graph nodes
    in_dim = 32         # input feature dim
    num_hidden = 16     # hidden dim per head
    num_heads = [4, 1]  # (hidden heads, output heads) -- last layer is Linear
    num_layers = 2
    num_classes = 8

    key = jax.random.PRNGKey(0)
    k_adj, k_x, k_par = jax.random.split(key, 3)

    # Deterministic synthetic graph: sparse random edges + self loops.
    adj = (jax.random.uniform(k_adj, (N, N)) < 0.1).astype(jnp.float32)
    adj = jnp.maximum(adj, jnp.eye(N, dtype=jnp.float32))

    x = jax.random.normal(k_x, (N, in_dim), dtype=jnp.float32)

    params = init_params(k_par, num_layers=num_layers, in_dim=in_dim,
                         num_hidden=num_hidden, num_heads=num_heads[0],
                         num_classes=num_classes)

    # TODO(synk): feat_drop / attn_drop are eval-mode (identity); training-mode
    # dropout is not implemented in-kernel.
    logits = gatlin_forward(params, adj, x,
                            num_heads=num_heads[0], head_dim=num_hidden)
    logits = jax.block_until_ready(logits)
    assert logits.shape == (N, num_classes)
    assert bool(jnp.all(jnp.isfinite(logits)))
    print("KERNEL_OK")
</pallas_src>

<mosaic_0001>
module attributes {stable_mosaic.version = 11 : i64} {
  func.func @gat_project_kernel(%arg0: i32, %arg1: memref<128x32xf32, #tpu.memory_space<vmem>>, %arg2: memref<32x64xf32, #tpu.memory_space<vmem>>, %arg3: memref<4x64xf32, #tpu.memory_space<vmem>>, %arg4: memref<64x4xf32, #tpu.memory_space<vmem>>, %arg5: memref<128x64xbf16, #tpu.memory_space<vmem>>, %arg6: memref<4x128xf32, #tpu.memory_space<vmem>>, %arg7: memref<128x4xf32, #tpu.memory_space<vmem>>) attributes {dimension_semantics = [#tpu.dimension_semantics<parallel>], iteration_bounds = array<i64: 1>, scalar_prefetch = 0 : i64, scratch_operands = 0 : i64, tpu.core_type = #tpu.core_type<tc>, window_params = [{transform_indices = @transform_0, window_bounds = array<i64: 128, 32>}, {pipeline_mode = #tpu.pipeline_mode<synchronous>, transform_indices = @transform_1, window_bounds = array<i64: 32, 64>}, {pipeline_mode = #tpu.pipeline_mode<synchronous>, transform_indices = @transform_2, window_bounds = array<i64: 4, 64>}, {pipeline_mode = #tpu.pipeline_mode<synchronous>, transform_indices = @transform_3, window_bounds = array<i64: 64, 4>}, {transform_indices = @transform_4, window_bounds = array<i64: 128, 64>}, {transform_indices = @transform_5, window_bounds = array<i64: 4, 128>}, {transform_indices = @transform_6, window_bounds = array<i64: 128, 4>}]} {
    %c0 = arith.constant 0 : index
    %c0_0 = arith.constant 0 : index
    %0 = vector.load %arg1[%c0, %c0_0] : memref<128x32xf32, #tpu.memory_space<vmem>>, vector<128x32xf32>
    %1 = arith.truncf %0 : vector<128x32xf32> to vector<128x32xbf16>
    %c0_1 = arith.constant 0 : index
    %c0_2 = arith.constant 0 : index
    %2 = vector.load %arg2[%c0_1, %c0_2] : memref<32x64xf32, #tpu.memory_space<vmem>>, vector<32x64xf32>
    %3 = arith.truncf %2 : vector<32x64xf32> to vector<32x64xbf16>
    %cst = arith.constant dense<0.000000e+00> : vector<128x64xf32>
    %4 = tpu.matmul %1, %3, %cst {dimension_numbers = #tpu.dot_dimension_numbers<[1], [0], [0], [1], [0, 0, 1, 1], [], []>} : vector<128x32xbf16>, vector<32x64xbf16>, vector<128x64xf32> -> vector<128x64xf32>
    %5 = arith.truncf %4 : vector<128x64xf32> to vector<128x64xbf16>
    %c0_3 = arith.constant 0 : index
    %c0_4 = arith.constant 0 : index
    %6 = vector.load %arg3[%c0_3, %c0_4] : memref<4x64xf32, #tpu.memory_space<vmem>>, vector<4x64xf32>
    %7 = arith.truncf %6 : vector<4x64xf32> to vector<4x64xbf16>
    %c0_5 = arith.constant 0 : index
    %c0_6 = arith.constant 0 : index
    %8 = vector.load %arg4[%c0_5, %c0_6] : memref<64x4xf32, #tpu.memory_space<vmem>>, vector<64x4xf32>
    %9 = arith.truncf %8 : vector<64x4xf32> to vector<64x4xbf16>
    %cst_7 = arith.constant dense<0.000000e+00> : vector<4x128xf32>
    %10 = tpu.matmul %7, %5, %cst_7 {dimension_numbers = #tpu.dot_dimension_numbers<[1], [1], [0], [0], [0, 0, 1, 0], [], []>} : vector<4x64xbf16>, vector<128x64xbf16>, vector<4x128xf32> -> vector<4x128xf32>
    %cst_8 = arith.constant dense<0.000000e+00> : vector<128x4xf32>
    %11 = tpu.matmul %5, %9, %cst_8 {dimension_numbers = #tpu.dot_dimension_numbers<[1], [0], [0], [1], [0, 0, 1, 1], [], []>} : vector<128x64xbf16>, vector<64x4xbf16>, vector<128x4xf32> -> vector<128x4xf32>
    %c0_9 = arith.constant 0 : index
    %c0_10 = arith.constant 0 : index
    %12 = vector.load %arg5[%c0_9, %c0_10] : memref<128x64xbf16, #tpu.memory_space<vmem>>, vector<128x64xbf16>
    tpu.vector_store %arg5[%c0_9, %c0_10], %5 {strides = array<i32>} : memref<128x64xbf16, #tpu.memory_space<vmem>>, vector<128x64xbf16>,
    %c0_11 = arith.constant 0 : index
    %c0_12 = arith.constant 0 : index
    %13 = vector.load %arg6[%c0_11, %c0_12] : memref<4x128xf32, #tpu.memory_space<vmem>>, vector<4x128xf32>
    tpu.vector_store %arg6[%c0_11, %c0_12], %10 {strides = array<i32>} : memref<4x128xf32, #tpu.memory_space<vmem>>, vector<4x128xf32>,
    %c0_13 = arith.constant 0 : index
    %c0_14 = arith.constant 0 : index
    %14 = vector.load %arg7[%c0_13, %c0_14] : memref<128x4xf32, #tpu.memory_space<vmem>>, vector<128x4xf32>
    tpu.vector_store %arg7[%c0_13, %c0_14], %11 {strides = array<i32>} : memref<128x4xf32, #tpu.memory_space<vmem>>, vector<128x4xf32>,
    return
  }
  func.func @transform_0(%arg0: i32) -> (i32, i32) {
    %c0_i32 = arith.constant 0 : i32
    %c0_i32_0 = arith.constant 0 : i32
    return %arg0, %c0_i32 : i32, i32
  }
  func.func @transform_1(%arg0: i32) -> (i32, i32) {
    %c0_i32 = arith.constant 0 : i32
    %c0_i32_0 = arith.constant 0 : i32
    %c0_i32_1 = arith.constant 0 : i32
    return %c0_i32, %c0_i32_0 : i32, i32
  }
  func.func @transform_2(%arg0: i32) -> (i32, i32) {
    %c0_i32 = arith.constant 0 : i32
    %c0_i32_0 = arith.constant 0 : i32
    %c0_i32_1 = arith.constant 0 : i32
    return %c0_i32, %c0_i32_0 : i32, i32
  }
  func.func @transform_3(%arg0: i32) -> (i32, i32) {
    %c0_i32 = arith.constant 0 : i32
    %c0_i32_0 = arith.constant 0 : i32
    %c0_i32_1 = arith.constant 0 : i32
    return %c0_i32, %c0_i32_0 : i32, i32
  }
  func.func @transform_4(%arg0: i32) -> (i32, i32) {
    %c0_i32 = arith.constant 0 : i32
    %c0_i32_0 = arith.constant 0 : i32
    return %arg0, %c0_i32 : i32, i32
  }
  func.func @transform_5(%arg0: i32) -> (i32, i32) {
    %c0_i32 = arith.constant 0 : i32
    %c0_i32_0 = arith.constant 0 : i32
    return %c0_i32, %arg0 : i32, i32
  }
  func.func @transform_6(%arg0: i32) -> (i32, i32) {
    %c0_i32 = arith.constant 0 : i32
    %c0_i32_0 = arith.constant 0 : i32
    return %arg0, %c0_i32 : i32, i32
  }
}

</mosaic_0001>

<llo_original>
// kernel: tpu_custom_call.1
$region0: #{tpu_custom_call.1}
  #allocation0 [shape = 'u32[]', space=smem, size = 0x4, offset = 0x4, fixed_abs, tag = 'smem constant byte address 0x4 - core index']
  #allocation1 [shape = 'u32[144,128]{1,0:T(1,128)}', space=vmem, size = 0x12000, scoped, tag = 'internal scratch']
  %s0 = inlined_call_operand.vmem [shape: f32[128,32], index: 0, kind: input, shape index: {}]
  %s1 = inlined_call_operand.vmem [shape: f32[32,64], index: 1, kind: input, shape index: {}]
  %s2 = inlined_call_operand.vmem [shape: f32[4,64], index: 2, kind: input, shape index: {}]
  %s3 = inlined_call_operand.vmem [shape: f32[64,4], index: 3, kind: input, shape index: {}]
  %s4 = inlined_call_operand.vmem [shape: bf16[128,64], index: 4, kind: output, shape index: {0}]
  %s5 = inlined_call_operand.hbm [shape: f32[4,128], index: 5, kind: output, shape index: {1}]
  %s6 = inlined_call_operand.vmem [shape: f32[128,4], index: 6, kind: output, shape index: {2}]
  %7 = xla_tuple %s4, %s5, %s6
  %s8 = sld [smem:[#allocation0]]
  $region42: #{tpu_custom_call.1} parent=0
    _
  %s10 = ssub.s32 1, %s8
  %s11 = scalar_select 0, %s10, %s8
  $region1: #{tpu_custom_call.1} parent=0
    #allocation2 [shape = 'u8[2048]{0}', space=vmem, size = 0x800, scoped, tag = 'output window, operand 1, single buffered']
    #allocation3 [shape = 's32[1]{0}', space=sflag, size = 0x4, scoped, tag = 'scoped memory for tpu_custom_call.1']
    %12 = vsyncpa [#allocation3], 0
    // Predicated region
    $region2: #{tpu_custom_call.1} parent=1 // pred_check
      _
    $region3: #{tpu_custom_call.1} parent=1 // pred_check_branch
      %14 = sbr.rel (0) target = $region5
    $region4: #{tpu_custom_call.1} parent=1 // pred_region
      _
    $region5: #{tpu_custom_call.1} parent=1 // pred_fallthru
      _
    // Predicated region
    $region6: #{tpu_custom_call.1} parent=1 // pred_check
      _
    $region7: #{tpu_custom_call.1} parent=1 // pred_check_branch
      %16 = sbr.rel (0) target = $region9
    $region8: #{tpu_custom_call.1} parent=1 // pred_region
      _
    $region9: #{tpu_custom_call.1} parent=1 // pred_fallthru
      _
    // Predicated region
    $region10: #{tpu_custom_call.1} parent=1 // pred_check
      _
    $region11: #{tpu_custom_call.1} parent=1 // pred_check_branch
      %18 = sbr.rel (0) target = $region13
    $region12: #{tpu_custom_call.1} parent=1 // pred_region
      _
    $region13: #{tpu_custom_call.1} parent=1 // pred_fallthru
      _
    // Predicated region
    $region14: #{tpu_custom_call.1} parent=1 // pred_check
      _
    $region15: #{tpu_custom_call.1} parent=1 // pred_check_branch
      %20 = sbr.rel (0) target = $region17
    $region16: #{tpu_custom_call.1} parent=1 // pred_region
      _
    $region17: #{tpu_custom_call.1} parent=1 // pred_fallthru
      _
    %v22 = vld [vmem:[%s0] sm:$0xff]
    %v23 = vld [vmem:[%s0 + $0x8] sm:$0xff]
    %v24 = vld [vmem:[%s0 + $0x10] sm:$0xff]
    %v25 = vld [vmem:[%s0 + $0x18] sm:$0xff]
    %v26 = vld [vmem:[%s0 + $0x20] sm:$0xff]
    %v27 = vld [vmem:[%s0 + $0x28] sm:$0xff]
    %v28 = vld [vmem:[%s0 + $0x30] sm:$0xff]
    %v29 = vld [vmem:[%s0 + $0x38] sm:$0xff]
    %v30 = vld [vmem:[%s0 + $0x40] sm:$0xff]
    %v31 = vld [vmem:[%s0 + $0x48] sm:$0xff]
    %v32 = vld [vmem:[%s0 + $0x50] sm:$0xff]
    %v33 = vld [vmem:[%s0 + $0x58] sm:$0xff]
    %v34 = vld [vmem:[%s0 + $0x60] sm:$0xff]
    %v35 = vld [vmem:[%s0 + $0x68] sm:$0xff]
    %v36 = vld [vmem:[%s0 + $0x70] sm:$0xff]
    %v37 = vld [vmem:[%s0 + $0x78] sm:$0xff]
    %v38 = vpack.c.bf16 %v23, %v22
    %v39 = vpack.c.bf16 %v25, %v24
    %v40 = vpack.c.bf16 %v27, %v26
    %v41 = vpack.c.bf16 %v29, %v28
    %v42 = vpack.c.bf16 %v31, %v30
    %v43 = vpack.c.bf16 %v33, %v32
    %v44 = vpack.c.bf16 %v35, %v34
    %v45 = vpack.c.bf16 %v37, %v36
    %v46 = vld [vmem:[%s1] sm:$0xff]
    %v47 = vld [vmem:[%s1 + $0x8] sm:$0xff]
    %v48 = vld [vmem:[%s1 + $0x10] sm:$0xff]
    %v49 = vld [vmem:[%s1 + $0x18] sm:$0xff]
    %v50 = vpack.c.bf16 %v47, %v46
    %v51 = vpack.c.bf16 %v49, %v48
    %vm52 = vcmask 261120
    %v54 = vsel %vm52, %v38, 0
    %v57 = vsel %vm52, %v39, 0
    %v60 = vsel %vm52, %v40, 0
    %v63 = vsel %vm52, %v41, 0
    %v66 = vsel %vm52, %v42, 0
    %v69 = vsel %vm52, %v43, 0
    %v72 = vsel %vm52, %v44, 0
    %v75 = vsel %vm52, %v45, 0
    %77 = vmatprep.subr.bf16.mxu0 0
    %78 = vmatpush1.bf16.msra.mxu0 %v50
    %79 = vmatprep.subr.bf16.mxu0 0
    %80 = vmatpush1.bf16.msra.mxu0 %v51
    %81 = vmatprep.subr.bf16.mxu0 0
    %82 = vmatpush1.bf16.msra.mxu0 0
    %83 = vmatprep.subr.bf16.mxu0 0
    %84 = vmatpush1.bf16.msra.mxu0 0
    %85 = vmatprep.subr.bf16.mxu0 0
    %86 = vmatpush1.bf16.msra.mxu0 0
    %87 = vmatprep.subr.bf16.mxu0 0
    %88 = vmatpush1.bf16.msra.mxu0 0
    %89 = vmatprep.subr.bf16.mxu0 0
    %90 = vmatpush1.bf16.msra.mxu0 0
    %91 = vmatprep.subr.bf16.mxu0 0
    %92 = vmatpush1.bf16.msra.mxu0 0
    %93 = vmatprep.subr.bf16.mxu0 0
    %94 = vmatpush1.bf16.msra.mxu0 0
    %95 = vmatprep.subr.bf16.mxu0 0
    %96 = vmatpush1.bf16.msra.mxu0 0
    %97 = vmatprep.subr.bf16.mxu0 0
    %98 = vmatpush1.bf16.msra.mxu0 0
    %99 = vmatprep.subr.bf16.mxu0 0
    %100 = vmatpush1.bf16.msra.mxu0 0
    %101 = vmatprep.subr.bf16.mxu0 0
    %102 = vmatpush1.bf16.msra.mxu0 0
    %103 = vmatprep.subr.bf16.mxu0 0
    %104 = vmatpush1.bf16.msra.mxu0 0
    %105 = vmatprep.subr.bf16.mxu0 0
    %106 = vmatpush1.bf16.msra.mxu0 0
    %107 = vmatprep.subr.bf16.mxu0 0
    %108 = vmatpush1.bf16.msra.mxu0 0
    %109 = vmatprep.mubr.bf16.mxu0 0
    %110 = vmatmul.mubr.bf16.gmra.mrb[0].mxu0 %v54
    %v111 = vpop.f32.mrb[0].mxu0
    %v112 = vadd.f32 0.0, %v111
    %v113 = vpop.f32.mrb[0].mxu0
    %v114 = vpop.f32.mrb[0].mxu0
    %v115 = vadd.f32 0.0, %v114
    %v116 = vpop.f32.mrb[0].mxu0
    %117 = vmatprep.mubr.bf16.mxu0 0
    %118 = vmatmul.mubr.bf16.gmra.mrb[0].mxu0 %v57
    %v119 = vpop.f32.mrb[0].mxu0
    %v120 = vadd.f32 0.0, %v119
    %v121 = vpop.f32.mrb[0].mxu0
    %v122 = vpop.f32.mrb[0].mxu0
    %v123 = vadd.f32 0.0, %v122
    %v124 = vpop.f32.mrb[0].mxu0
    %125 = vmatprep.mubr.bf16.mxu0 0
    %126 = vmatmul.mubr.bf16.gmra.mrb[0].mxu0 %v60
    %v127 = vpop.f32.mrb[0].mxu0
    %v128 = vadd.f32 0.0, %v127
    %v129 = vpop.f32.mrb[0].mxu0
    %v130 = vpop.f32.mrb[0].mxu0
    %v131 = vadd.f32 0.0, %v130
    %v132 = vpop.f32.mrb[0].mxu0
    %133 = vmatprep.mubr.bf16.mxu0 0
    %134 = vmatmul.mubr.bf16.gmra.mrb[0].mxu0 %v63
    %v135 = vpop.f32.mrb[0].mxu0
    %v136 = vadd.f32 0.0, %v135
    %v137 = vpop.f32.mrb[0].mxu0
    %v138 = vpop.f32.mrb[0].mxu0
    %v139 = vadd.f32 0.0, %v138
    %v140 = vpop.f32.mrb[0].mxu0
    %141 = vmatprep.mubr.bf16.mxu0 0
    %142 = vmatmul.mubr.bf16.gmra.mrb[0].mxu0 %v66
    %v143 = vpop.f32.mrb[0].mxu0
    %v144 = vadd.f32 0.0, %v143
    %v145 = vpop.f32.mrb[0].mxu0
    %v146 = vpop.f32.mrb[0].mxu0
    %v147 = vadd.f32 0.0, %v146
    %v148 = vpop.f32.mrb[0].mxu0
    %149 = vmatprep.mubr.bf16.mxu0 0
    %150 = vmatmul.mubr.bf16.gmra.mrb[0].mxu0 %v69
    %v151 = vpop.f32.mrb[0].mxu0
    %v152 = vadd.f32 0.0, %v151
    %v153 = vpop.f32.mrb[0].mxu0
    %v154 = vpop.f32.mrb[0].mxu0
    %v155 = vadd.f32 0.0, %v154
    %v156 = vpop.f32.mrb[0].mxu0
    %157 = vmatprep.mubr.bf16.mxu0 0
    %158 = vmatmul.mubr.bf16.gmra.mrb[0].mxu0 %v72
    %v159 = vpop.f32.mrb[0].mxu0
    %v160 = vadd.f32 0.0, %v159
    %v161 = vpop.f32.mrb[0].mxu0
    %v162 = vpop.f32.mrb[0].mxu0
    %v163 = vadd.f32 0.0, %v162
    %v164 = vpop.f32.mrb[0].mxu0
    %165 = vmatprep.mubr.bf16.mxu0 0
    %166 = vmatmul.mubr.bf16.gmra.mrb[0].mxu0 %v75
    %v167 = vpop.f32.mrb[0].mxu0
    %v168 = vadd.f32 0.0, %v167
    %v169 = vpop.f32.mrb[0].mxu0
    %v170 = vpop.f32.mrb[0].mxu0
    %v171 = vadd.f32 0.0, %v170
    %v172 = vpop.f32.mrb[0].mxu0
    %173 = vdwg.mxu0
    %v174 = vpack.c.bf16 %v115, %v112
    %v175 = vpack.c.bf16 %v123, %v120
    %v176 = vpack.c.bf16 %v131, %v128
    %v177 = vpack.c.bf16 %v139, %v136
    %v178 = vpack.c.bf16 %v147, %v144
    %v179 = vpack.c.bf16 %v155, %v152
    %v180 = vpack.c.bf16 %v163, %v160
    %v181 = vpack.c.bf16 %v171, %v168
    %v182 = vld [vmem:[%s2] sm:$0xf]
    %v183 = vpack.c.bf16 %v182, %v182
    %v184 = vld [vmem:[%s3] sm:$0xff]
    %v185 = vld [vmem:[%s3 + $0x8] sm:$0xff]
    %v186 = vld [vmem:[%s3 + $0x10] sm:$0xff]
    %v187 = vld [vmem:[%s3 + $0x18] sm:$0xff]
    %v188 = vld [vmem:[%s3 + $0x20] sm:$0xff]
    %v189 = vld [vmem:[%s3 + $0x28] sm:$0xff]
    %v190 = vld [vmem:[%s3 + $0x30] sm:$0xff]
    %v191 = vld [vmem:[%s3 + $0x38] sm:$0xff]
    %v192 = vpack.c.bf16 %v185, %v184
    %v193 = vpack.c.bf16 %v187, %v186
    %v194 = vpack.c.bf16 %v189, %v188
    %v195 = vpack.c.bf16 %v191, %v190
    %vm196 = vcmask 523264
    %v198 = vsel %vm196, %v183, 0
    %v201 = vsel %vm196, %v174, 0
    %v204 = vsel %vm196, %v175, 0
    %v207 = vsel %vm196, %v176, 0
    %v210 = vsel %vm196, %v177, 0
    %v213 = vsel %vm196, %v178, 0
    %v216 = vsel %vm196, %v179, 0
    %v219 = vsel %vm196, %v180, 0
    %v222 = vsel %vm196, %v181, 0
    %224 = vmatprep.subr.bf16.mxu0 0
    %225 = vmatpush1.bf16.xpose.msra.mxu0 %v201
    %226 = vmatprep.subr.bf16.mxu0 0
    %227 = vmatpush1.bf16.xpose.msra.mxu0 %v204
    %228 = vmatprep.subr.bf16.mxu0 0
    %229 = vmatpush1.bf16.xpose.msra.mxu0 %v207
    %230 = vmatprep.subr.bf16.mxu0 0
    %231 = vmatpush1.bf16.xpose.msra.mxu0 %v210
    %232 = vmatprep.subr.bf16.mxu0 0
    %233 = vmatpush1.bf16.xpose.msra.mxu0 %v213
    %234 = vmatprep.subr.bf16.mxu0 0
    %235 = vmatpush1.bf16.xpose.msra.mxu0 %v216
    %236 = vmatprep.subr.bf16.mxu0 0
    %237 = vmatpush1.bf16.xpose.msra.mxu0 %v219
    %238 = vmatprep.subr.bf16.mxu0 0
    %239 = vmatpush1.bf16.xpose.msra.mxu0 %v222
    %240 = vmatprep.subr.bf16.mxu0 0
    %241 = vmatpush1.bf16.xpose.msra.mxu0 0
    %242 = vmatprep.subr.bf16.mxu0 0
    %243 = vmatpush1.bf16.xpose.msra.mxu0 0
    %244 = vmatprep.subr.bf16.mxu0 0
    %245 = vmatpush1.bf16.xpose.msra.mxu0 0
    %246 = vmatprep.subr.bf16.mxu0 0
    %247 = vmatpush1.bf16.xpose.msra.mxu0 0
    %248 = vmatprep.subr.bf16.mxu0 0
    %249 = vmatpush1.bf16.xpose.msra.mxu0 0
    %250 = vmatprep.subr.bf16.mxu0 0
    %251 = vmatpush1.bf16.xpose.msra.mxu0 0
    %252 = vmatprep.subr.bf16.mxu0 0
    %253 = vmatpush1.bf16.xpose.msra.mxu0 0
    %254 = vmatprep.subr.bf16.mxu0 0
    %255 = vmatpush1.bf16.xpose.msra.mxu0 0
    %256 = vmatprep.mubr.bf16.mxu0 0
    %257 = vmatmul.mubr.bf16.gmra.mrb[0].mxu0 %v198
    %v258 = vpop.f32.mrb[0].mxu0
    %v259 = vadd.f32 0.0, %v258
    %v260 = vpop.f32.mrb[0].mxu0
    %v261 = vpop.f32.mrb[0].mxu0
    %v262 = vpop.f32.mrb[0].mxu0
    %263 = vdwg.mxu0
    %264 = vmatprep.subr.bf16.mxu0 0
    %265 = vmatpush1.bf16.msra.mxu0 %v192
    %266 = vmatprep.subr.bf16.mxu0 0
    %267 = vmatpush1.bf16.msra.mxu0 %v193
    %268 = vmatprep.subr.bf16.mxu0 0
    %269 = vmatpush1.bf16.msra.mxu0 %v194
    %270 = vmatprep.subr.bf16.mxu0 0
    %271 = vmatpush1.bf16.msra.mxu0 %v195
    %272 = vmatprep.subr.bf16.mxu0 0
    %273 = vmatpush1.bf16.msra.mxu0 0
    %274 = vmatprep.subr.bf16.mxu0 0
    %275 = vmatpush1.bf16.msra.mxu0 0
    %276 = vmatprep.subr.bf16.mxu0 0
    %277 = vmatpush1.bf16.msra.mxu0 0
    %278 = vmatprep.subr.bf16.mxu0 0
    %279 = vmatpush1.bf16.msra.mxu0 0
    %280 = vmatprep.subr.bf16.mxu0 0
    %281 = vmatpush1.bf16.msra.mxu0 0
    %282 = vmatprep.subr.bf16.mxu0 0
    %283 = vmatpush1.bf16.msra.mxu0 0
    %284 = vmatprep.subr.bf16.mxu0 0
    %285 = vmatpush1.bf16.msra.mxu0 0
    %286 = vmatprep.subr.bf16.mxu0 0
    %287 = vmatpush1.bf16.msra.mxu0 0
    %288 = vmatprep.subr.bf16.mxu0 0
    %289 = vmatpush1.bf16.msra.mxu0 0
    %290 = vmatprep.subr.bf16.mxu0 0
    %291 = vmatpush1.bf16.msra.mxu0 0
    %292 = vmatprep.subr.bf16.mxu0 0
    %293 = vmatpush1.bf16.msra.mxu0 0
    %294 = vmatprep.subr.bf16.mxu0 0
    %295 = vmatpush1.bf16.msra.mxu0 0
    %296 = vmatprep.mubr.bf16.mxu0 0
    %297 = vmatmul.mubr.bf16.gmra.mrb[0].mxu0 %v201
    %v298 = vpop.f32.mrb[0].mxu0
    %v299 = vadd.f32 0.0, %v298
    %v300 = vpop.f32.mrb[0].mxu0
    %v301 = vpop.f32.mrb[0].mxu0
    %v302 = vadd.f32 0.0, %v301
    %v303 = vpop.f32.mrb[0].mxu0
    %304 = vmatprep.mubr.bf16.mxu0 0
    %305 = vmatmul.mubr.bf16.gmra.mrb[0].mxu0 %v204
    %v306 = vpop.f32.mrb[0].mxu0
    %v307 = vadd.f32 0.0, %v306
    %v308 = vpop.f32.mrb[0].mxu0
    %v309 = vpop.f32.mrb[0].mxu0
    %v310 = vadd.f32 0.0, %v309
    %v311 = vpop.f32.mrb[0].mxu0
    %312 = vmatprep.mubr.bf16.mxu0 0
    %313 = vmatmul.mubr.bf16.gmra.mrb[0].mxu0 %v207
    %v314 = vpop.f32.mrb[0].mxu0
    %v315 = vadd.f32 0.0, %v314
    %v316 = vpop.f32.mrb[0].mxu0
    %v317 = vpop.f32.mrb[0].mxu0
    %v318 = vadd.f32 0.0, %v317
    %v319 = vpop.f32.mrb[0].mxu0
    %320 = vmatprep.mubr.bf16.mxu0 0
    %321 = vmatmul.mubr.bf16.gmra.mrb[0].mxu0 %v210
    %v322 = vpop.f32.mrb[0].mxu0
    %v323 = vadd.f32 0.0, %v322
    %v324 = vpop.f32.mrb[0].mxu0
    %v325 = vpop.f32.mrb[0].mxu0
    %v326 = vadd.f32 0.0, %v325
    %v327 = vpop.f32.mrb[0].mxu0
    %328 = vmatprep.mubr.bf16.mxu0 0
    %329 = vmatmul.mubr.bf16.gmra.mrb[0].mxu0 %v213
    %v330 = vpop.f32.mrb[0].mxu0
    %v331 = vadd.f32 0.0, %v330
    %v332 = vpop.f32.mrb[0].mxu0
    %v333 = vpop.f32.mrb[0].mxu0
    %v334 = vadd.f32 0.0, %v333
    %v335 = vpop.f32.mrb[0].mxu0
    %336 = vmatprep.mubr.bf16.mxu0 0
    %337 = vmatmul.mubr.bf16.gmra.mrb[0].mxu0 %v216
    %v338 = vpop.f32.mrb[0].mxu0
    %v339 = vadd.f32 0.0, %v338
    %v340 = vpop.f32.mrb[0].mxu0
    %v341 = vpop.f32.mrb[0].mxu0
    %v342 = vadd.f32 0.0, %v341
    %v343 = vpop.f32.mrb[0].mxu0
    %344 = vmatprep.mubr.bf16.mxu0 0
    %345 = vmatmul.mubr.bf16.gmra.mrb[0].mxu0 %v219
    %v346 = vpop.f32.mrb[0].mxu0
    %v347 = vadd.f32 0.0, %v346
    %v348 = vpop.f32.mrb[0].mxu0
    %v349 = vpop.f32.mrb[0].mxu0
    %v350 = vadd.f32 0.0, %v349
    %v351 = vpop.f32.mrb[0].mxu0
    %352 = vmatprep.mubr.bf16.mxu0 0
    %353 = vmatmul.mubr.bf16.gmra.mrb[0].mxu0 %v222
    %v354 = vpop.f32.mrb[0].mxu0
    %v355 = vadd.f32 0.0, %v354
    %v356 = vpop.f32.mrb[0].mxu0
    %v357 = vpop.f32.mrb[0].mxu0
    %v358 = vadd.f32 0.0, %v357
    %v359 = vpop.f32.mrb[0].mxu0
    %360 = vdwg.mxu0
    %v369 = vunpack.c.l.b16 %v174
    %v370 = vunpack.c.h.b16 %v174
    %v371 = vunpack.c.l.b16 %v175
    %v372 = vunpack.c.h.b16 %v175
    %v373 = vunpack.c.l.b16 %v176
    %v374 = vunpack.c.h.b16 %v176
    %v375 = vunpack.c.l.b16 %v177
    %v376 = vunpack.c.h.b16 %v177
    %v377 = vunpack.c.l.b16 %v178
    %v378 = vunpack.c.h.b16 %v178
    %v379 = vunpack.c.l.b16 %v179
    %v380 = vunpack.c.h.b16 %v179
    %v381 = vunpack.c.l.b16 %v180
    %v382 = vunpack.c.h.b16 %v180
    %v383 = vunpack.c.l.b16 %v181
    %v384 = vunpack.c.h.b16 %v181
    %v385 = vpack.c.b16 %v369, %v369
    %v386 = vpack.c.b16 %v370, %v370
    %v387 = vpack.c.b16 %v371, %v371
    %v388 = vpack.c.b16 %v372, %v372
    %v389 = vpack.c.b16 %v373, %v373
    %v390 = vpack.c.b16 %v374, %v374
    %v391 = vpack.c.b16 %v375, %v375
    %v392 = vpack.c.b16 %v376, %v376
    %v393 = vpack.c.b16 %v377, %v377
    %v394 = vpack.c.b16 %v378, %v378
    %v395 = vpack.c.b16 %v379, %v379
    %v396 = vpack.c.b16 %v380, %v380
    %v397 = vpack.c.b16 %v381, %v381
    %v398 = vpack.c.b16 %v382, %v382
    %v399 = vpack.c.b16 %v383, %v383
    %v400 = vpack.c.b16 %v384, %v384
    %vm417 = vcmask 519168
    %418 = vst.msk [vmem:[%s4] sm:$0xf] %vm417, %v385
    %419 = vst.msk [vmem:[%s4 + $0x4] sm:$0xf] %vm417, %v386
    %420 = vst.msk [vmem:[%s4 + $0x8] sm:$0xf] %vm417, %v387
    %421 = vst.msk [vmem:[%s4 + $0xc] sm:$0xf] %vm417, %v388
    %422 = vst.msk [vmem:[%s4 + $0x10] sm:$0xf] %vm417, %v389
    %423 = vst.msk [vmem:[%s4 + $0x14] sm:$0xf] %vm417, %v390
    %424 = vst.msk [vmem:[%s4 + $0x18] sm:$0xf] %vm417, %v391
    %425 = vst.msk [vmem:[%s4 + $0x1c] sm:$0xf] %vm417, %v392
    %426 = vst.msk [vmem:[%s4 + $0x20] sm:$0xf] %vm417, %v393
    %427 = vst.msk [vmem:[%s4 + $0x24] sm:$0xf] %vm417, %v394
    %428 = vst.msk [vmem:[%s4 + $0x28] sm:$0xf] %vm417, %v395
    %429 = vst.msk [vmem:[%s4 + $0x2c] sm:$0xf] %vm417, %v396
    %430 = vst.msk [vmem:[%s4 + $0x30] sm:$0xf] %vm417, %v397
    %431 = vst.msk [vmem:[%s4 + $0x34] sm:$0xf] %vm417, %v398
    %432 = vst.msk [vmem:[%s4 + $0x38] sm:$0xf] %vm417, %v399
    %433 = vst.msk [vmem:[%s4 + $0x3c] sm:$0xf] %vm417, %v400
    %434 = vst [vmem:[#allocation2] sm:$0xf] %v259
    %vm435 = vcmask 31744
    %436 = vst.msk [vmem:[%s6] sm:$0xff] %vm435, %v299
    %437 = vst.msk [vmem:[%s6 + $0x8] sm:$0xff] %vm435, %v302
    %438 = vst.msk [vmem:[%s6 + $0x10] sm:$0xff] %vm435, %v307
    %439 = vst.msk [vmem:[%s6 + $0x18] sm:$0xff] %vm435, %v310
    %440 = vst.msk [vmem:[%s6 + $0x20] sm:$0xff] %vm435, %v315
    %441 = vst.msk [vmem:[%s6 + $0x28] sm:$0xff] %vm435, %v318
    %442 = vst.msk [vmem:[%s6 + $0x30] sm:$0xff] %vm435, %v323
    %443 = vst.msk [vmem:[%s6 + $0x38] sm:$0xff] %vm435, %v326
    %444 = vst.msk [vmem:[%s6 + $0x40] sm:$0xff] %vm435, %v331
    %445 = vst.msk [vmem:[%s6 + $0x48] sm:$0xff] %vm435, %v334
    %446 = vst.msk [vmem:[%s6 + $0x50] sm:$0xff] %vm435, %v339
    %447 = vst.msk [vmem:[%s6 + $0x58] sm:$0xff] %vm435, %v342
    %448 = vst.msk [vmem:[%s6 + $0x60] sm:$0xff] %vm435, %v347
    %449 = vst.msk [vmem:[%s6 + $0x68] sm:$0xff] %vm435, %v350
    %450 = vst.msk [vmem:[%s6 + $0x70] sm:$0xff] %vm435, %v355
    %451 = vst.msk [vmem:[%s6 + $0x78] sm:$0xff] %vm435, %v358
    // Predicated region
    $region18: #{tpu_custom_call.1} parent=1 // pred_check
      _
    $region19: #{tpu_custom_call.1} parent=1 // pred_check_branch
      %453 = sbr.rel (0) target = $region21
    $region20: #{tpu_custom_call.1} parent=1 // pred_region
      _
    $region21: #{tpu_custom_call.1} parent=1 // pred_fallthru
      _
    // Predicated region
    $region22: #{tpu_custom_call.1} parent=1 // pred_check
      _
    $region23: #{tpu_custom_call.1} parent=1 // pred_check_branch
      %455 = sbr.rel (0) target = $region25
    $region24: #{tpu_custom_call.1} parent=1 // pred_region
      %s457 = ssub.s32 64, 64
      %458 = vsyncadd [#allocation3], %s457
      %s460 = sshll.u32 [#allocation2], 4
      %s461 = int_to_ptr.vmem [resolvable:$true] %s460
      %463 = dma.vmem_to_hbm [thread:$0]  %s461, 64, %s5, [#allocation3]
    $region25: #{tpu_custom_call.1} parent=1 // pred_fallthru
      _
    // Predicated region
    $region26: #{tpu_custom_call.1} parent=1 // pred_check
      _
    $region27: #{tpu_custom_call.1} parent=1 // pred_check_branch
      %465 = sbr.rel (0) target = $region29
    $region28: #{tpu_custom_call.1} parent=1 // pred_region
      _
    $region29: #{tpu_custom_call.1} parent=1 // pred_fallthru
      _
    // Predicated region
    $region30: #{tpu_custom_call.1} parent=1 // pred_check
      _
    $region31: #{tpu_custom_call.1} parent=1 // pred_check_branch
      %467 = sbr.rel (0) target = $region33
    $region32: #{tpu_custom_call.1} parent=1 // pred_region
      _
    $region33: #{tpu_custom_call.1} parent=1 // pred_fallthru
      _
    // Predicated region
    $region34: #{tpu_custom_call.1} parent=1 // pred_check
      _
    $region35: #{tpu_custom_call.1} parent=1 // pred_check_branch
      %469 = sbr.rel (0) target = $region37
    $region36: #{tpu_custom_call.1} parent=1 // pred_region
      %470 = dma.done [#allocation3], 64
    $region37: #{tpu_custom_call.1} parent=1 // pred_fallthru
      _
    // Predicated region
    $region38: #{tpu_custom_call.1} parent=1 // pred_check
      _
    $region39: #{tpu_custom_call.1} parent=1 // pred_check_branch
      %472 = sbr.rel (0) target = $region41
    $region40: #{tpu_custom_call.1} parent=1 // pred_region
      _
    $region41: #{tpu_custom_call.1} parent=1 // pred_fallthru
      _
    %473 = vsyncpa [#allocation3], 1

</llo_original>
